<compile_context>
chip_gen: v5e
topology: v5e:2x2
jax: 0.10.0
libtpu: 0.0.40
codegen_flags: <defaults>
</compile_context>

<pallas_src>
import jax
import jax.numpy as jnp
from jax.experimental import pallas as pl
from jax.experimental.pallas import tpu as pltpu


# --------------------------------------------------------------------------- #
# Kernel
# --------------------------------------------------------------------------- #
def _make_causal_conv_kernel(K, activation):
    """One grid step = `bblk` whole batch elements, full time axis (lane dim)."""

    def kernel(x_ref, w_ref, b_ref, o_ref, acc_ref):
        # x_ref:   (bblk, C_in, T)     input block, NCW
        # w_ref:   (K, C_out, C_in)    tap-major weight
        # b_ref:   (C_out, 1)          bias, f32
        # o_ref:   (bblk, C_out, T)    output block, NCW
        # acc_ref: (bblk, C_out, T)    f32 VMEM accumulator
        bblk, C_in, T = x_ref.shape
        C_out = w_ref.shape[1]

        x = x_ref[...]                                   # (bblk, C_in, T)
        w = w_ref[...]                                   # (K, C_out, C_in)

        # Batched MXU contraction over C_in; bblk is the dot_general batch dim
        # (the weight broadcast is tiny and keeps the result in NCW order, so
        #  no in-kernel transpose is needed).
        dnums = (((2,), (1,)), ((0,), (0,)))

        def tap_matmul(k, x_tap):
            w_k = jnp.broadcast_to(w[k], (bblk, C_out, C_in))
            return jax.lax.dot_general(
                w_k, x_tap, dimension_numbers=dnums,
                preferred_element_type=jnp.float32)       # (bblk, C_out, T_tap)

        # Tap K-1 has zero causal shift: it initializes the accumulator.
        acc_ref[...] = tap_matmul(K - 1, x)

        # Remaining taps: tap k reads x[..., t-s] (s = K-1-k), i.e. contributes
        # x[..., :T-s] to output lanes [s:].  Lanes [:s] get the implicit
        # causal zero-padding for free (accumulator untouched there).
        for k in range(K - 1):                            # static unroll, K small
            s = K - 1 - k
            if s >= T:
                continue                                  # whole tap out of range
            acc_ref[:, :, s:] += tap_matmul(k, x[:, :, :T - s])

        y = acc_ref[...] + b_ref[...]                     # (C_out,1) lane-broadcast
        if activation == "relu":
            y = jnp.maximum(y, 0.0)
        elif activation == "tanh":
            y = jnp.tanh(y)
        elif activation == "sigmoid":
            y = jax.nn.sigmoid(y)
        o_ref[...] = y.astype(o_ref.dtype)

    return kernel


# --------------------------------------------------------------------------- #
# Block-size / VMEM sizing
# --------------------------------------------------------------------------- #
def _vmem_limit_bytes():
    """Scoped-VMEM limit: ~half of physical VMEM, clamped to [32, 64] MiB."""
    try:
        cap = pltpu.get_tpu_info().vmem_capacity_bytes
    except Exception:
        cap = 64 * 1024 * 1024        # conservative: v7x per-TensorCore VMEM
    return int(max(32 * 1024 * 1024, min(cap // 2, 64 * 1024 * 1024)))


def _pick_bblk(B, T, bytes_per_batch_elem, budget_bytes):
    """Largest divisor of B whose per-step VMEM footprint fits the budget."""
    bblk = max(1, min(B, budget_bytes // max(bytes_per_batch_elem, 1)))
    while B % bblk:
        bblk -= 1
    # Give the v7x megacore (2 TensorCores) at least 2 "parallel" blocks when
    # there is enough work to be worth splitting; on 1-TC chips the extra grid
    # step costs ~0.35us, i.e. noise at that size.
    if bblk == B and B >= 2 and B * T >= 256:
        for d in range(2, B + 1):
            if B % d == 0:
                bblk = B // d
                break
    return bblk


# --------------------------------------------------------------------------- #
# Wrapper
# --------------------------------------------------------------------------- #
def convnet1d_forward(x, weight, bias, *, activation="relu", out_dtype=None):
    """Causal Conv1d (pad=K-1, crop right) + bias + activation.

    x: (B, C_in, T), weight: (C_out, C_in, K), bias: (C_out,).
    Returns (B, C_out, T) in the same NCW layout as PyTorch's Conv1d.
    """
    B, C_in, T = x.shape
    C_out, C_in_w, K = weight.shape
    assert C_in_w == C_in, "groups != 1 not supported"   # TODO(synk): grouped conv
    out_dtype = x.dtype if out_dtype is None else out_dtype

    # Tap-major weight (K, C_out, C_in): per-tap slice is a leading-dim index
    # in-kernel.  Tiny array; the transpose is negligible.
    w_t = jnp.transpose(weight, (2, 0, 1)).astype(x.dtype)
    bias2d = bias.reshape(C_out, 1).astype(jnp.float32)

    in_itemsize = jnp.dtype(x.dtype).itemsize
    out_itemsize = jnp.dtype(out_dtype).itemsize

    vmem_limit = _vmem_limit_bytes()
    budget = int(0.6 * vmem_limit)
    # Per-step VMEM per batch element: double-buffered in/out blocks + f32 acc.
    per_b = (2 * C_in * T * in_itemsize
             + 2 * C_out * T * out_itemsize
             + C_out * T * 4)
    bblk = _pick_bblk(B, T, per_b, budget)
    n_blk = B // bblk

    # Honest, post-restructure cost estimate (advisory for XLA scheduling).
    flops = 2 * B * C_out * C_in * K * T
    transcendentals = B * C_out * T if activation in ("tanh", "sigmoid") else 0
    bytes_accessed = (x.size * in_itemsize
                      + n_blk * (w_t.size * jnp.dtype(x.dtype).itemsize
                                 + bias2d.size * 4)
                      + B * C_out * T * out_itemsize)

    kernel = _make_causal_conv_kernel(K, activation)

    return pl.pallas_call(
        kernel,
        out_shape=jax.ShapeDtypeStruct((B, C_out, T), out_dtype),
        grid_spec=pltpu.PrefetchScalarGridSpec(
            num_scalar_prefetch=0,
            grid=(n_blk,),
            in_specs=[
                pl.BlockSpec((bblk, C_in, T), lambda i: (i, 0, 0)),
                pl.BlockSpec((K, C_out, C_in), lambda i: (0, 0, 0)),
                pl.BlockSpec((C_out, 1), lambda i: (0, 0)),
            ],
            out_specs=pl.BlockSpec((bblk, C_out, T), lambda i: (i, 0, 0)),
            scratch_shapes=[pltpu.VMEM((bblk, C_out, T), jnp.float32)],
        ),
        compiler_params=pltpu.CompilerParams(
            dimension_semantics=("parallel",),
            vmem_limit_bytes=vmem_limit,
        ),
        cost_estimate=pl.CostEstimate(
            flops=flops, transcendentals=transcendentals,
            bytes_accessed=bytes_accessed),
    )(x, w_t, bias2d)


# --------------------------------------------------------------------------- #
# Pure-JAX reference
# --------------------------------------------------------------------------- #
def _reference(x, weight, bias, activation="relu"):
    K = weight.shape[-1]
    y = jax.lax.conv_general_dilated(
        x, weight,
        window_strides=(1,),
        padding=[(K - 1, 0)],
        dimension_numbers=("NCH", "OIH", "NCH"),
    )
    y = y + bias[None, :, None]
    if activation == "relu":
        y = jnp.maximum(y, 0.0)
    elif activation == "tanh":
        y = jnp.tanh(y)
    elif activation == "sigmoid":
        y = jax.nn.sigmoid(y)
    return y


# --------------------------------------------------------------------------- #
# Demo / self-test
# --------------------------------------------------------------------------- #
if __name__ == "__main__":
    # ConvNet1d(in_channels=4, out_channels=8, kernel_size=3, groups=1,
    #           use_norm=None, activation='relu')
    B, C_in, C_out, K, T = 2, 4, 8, 3, 16

    key = jax.random.PRNGKey(0)
    kx, kw, kb = jax.random.split(key, 3)
    x = jax.random.normal(kx, (B, C_in, T), dtype=jnp.float32)
    scale = 1.0 / (C_in * K) ** 0.5
    weight = jax.random.uniform(kw, (C_out, C_in, K), jnp.float32, -scale, scale)
    bias = jax.random.uniform(kb, (C_out,), jnp.float32, -scale, scale)

    y = convnet1d_forward(x, weight, bias)
    y = jax.block_until_ready(y)
    assert y.shape == (B, C_out, T)

    # Kernel and reference both run the matmul with f32 operands; tolerance is
    # kept at 2e-2 to cover possible bf16-pass matmul defaults on the MXU on
    # either side (values are O(0.5), so real bugs blow well past this).
    y_ref = _reference(x, weight, bias)
    assert jnp.allclose(y, y_ref, atol=2e-2, rtol=2e-2), "mismatch vs f32 reference"

    print("KERNEL_OK")
</pallas_src>

<mosaic_0001>
module attributes {stable_mosaic.version = 11 : i64} {
  func.func @kernel(%arg0: i32, %arg1: memref<2x4x16xf32, #tpu.memory_space<vmem>>, %arg2: memref<3x8x4xf32, #tpu.memory_space<vmem>>, %arg3: memref<8x1xf32, #tpu.memory_space<vmem>>, %arg4: memref<2x8x16xf32, #tpu.memory_space<vmem>>, %arg5: memref<2x8x16xf32, #tpu.memory_space<vmem>>) attributes {dimension_semantics = [#tpu.dimension_semantics<parallel>], iteration_bounds = array<i64: 1>, scalar_prefetch = 0 : i64, scratch_operands = 1 : i64, tpu.core_type = #tpu.core_type<tc>, window_params = [{transform_indices = @transform_0, window_bounds = array<i64: 2, 4, 16>}, {pipeline_mode = #tpu.pipeline_mode<synchronous>, transform_indices = @transform_1, window_bounds = array<i64: 3, 8, 4>}, {pipeline_mode = #tpu.pipeline_mode<synchronous>, transform_indices = @transform_2, window_bounds = array<i64: 8, 1>}, {transform_indices = @transform_3, window_bounds = array<i64: 2, 8, 16>}]} {
    %c0 = arith.constant 0 : index
    %c0_0 = arith.constant 0 : index
    %c0_1 = arith.constant 0 : index
    %0 = vector.load %arg1[%c0, %c0_0, %c0_1] : memref<2x4x16xf32, #tpu.memory_space<vmem>>, vector<2x4x16xf32>
    %c0_2 = arith.constant 0 : index
    %c0_3 = arith.constant 0 : index
    %c0_4 = arith.constant 0 : index
    %1 = vector.load %arg2[%c0_2, %c0_3, %c0_4] : memref<3x8x4xf32, #tpu.memory_space<vmem>>, vector<3x8x4xf32>
    %2 = vector.extract_strided_slice %1 {offsets = [2, 0, 0], sizes = [1, 8, 4], strides = [1, 1, 1]} : vector<3x8x4xf32> to vector<1x8x4xf32>
    %3 = vector.shape_cast %2 : vector<1x8x4xf32> to vector<8x4xf32>
    %4 = vector.shape_cast %3 : vector<8x4xf32> to vector<1x8x4xf32>
    %5 = vector.broadcast %4 : vector<1x8x4xf32> to vector<2x8x4xf32>
    %cst = arith.constant dense<0.000000e+00> : vector<2x8x16xf32>
    %6 = tpu.matmul %5, %0, %cst {dimension_numbers = #tpu.dot_dimension_numbers<[2], [1], [1], [2], [0, 0, 0, 1, 1, 2], [0], [0]>} : vector<2x8x4xf32>, vector<2x4x16xf32>, vector<2x8x16xf32> -> vector<2x8x16xf32>
    %c0_5 = arith.constant 0 : index
    %c0_6 = arith.constant 0 : index
    %c0_7 = arith.constant 0 : index
    %7 = vector.load %arg5[%c0_5, %c0_6, %c0_7] : memref<2x8x16xf32, #tpu.memory_space<vmem>>, vector<2x8x16xf32>
    tpu.vector_store %arg5[%c0_5, %c0_6, %c0_7], %6 {strides = array<i32>} : memref<2x8x16xf32, #tpu.memory_space<vmem>>, vector<2x8x16xf32>,
    %c0_8 = arith.constant 0 : index
    %c0_9 = arith.constant 0 : index
    %c2 = arith.constant 2 : index
    %8 = vector.load %arg5[%c0_8, %c0_9, %c2] : memref<2x8x16xf32, #tpu.memory_space<vmem>>, vector<2x8x14xf32>
    %9 = vector.extract_strided_slice %0 {offsets = [0, 0, 0], sizes = [2, 4, 14], strides = [1, 1, 1]} : vector<2x4x16xf32> to vector<2x4x14xf32>
    %10 = vector.extract_strided_slice %1 {offsets = [0, 0, 0], sizes = [1, 8, 4], strides = [1, 1, 1]} : vector<3x8x4xf32> to vector<1x8x4xf32>
    %11 = vector.shape_cast %10 : vector<1x8x4xf32> to vector<8x4xf32>
    %12 = vector.shape_cast %11 : vector<8x4xf32> to vector<1x8x4xf32>
    %13 = vector.broadcast %12 : vector<1x8x4xf32> to vector<2x8x4xf32>
    %cst_10 = arith.constant dense<0.000000e+00> : vector<2x8x14xf32>
    %14 = tpu.matmul %13, %9, %cst_10 {dimension_numbers = #tpu.dot_dimension_numbers<[2], [1], [1], [2], [0, 0, 0, 1, 1, 2], [0], [0]>} : vector<2x8x4xf32>, vector<2x4x14xf32>, vector<2x8x14xf32> -> vector<2x8x14xf32>
    %15 = arith.addf %8, %14 : vector<2x8x14xf32>
    %c0_11 = arith.constant 0 : index
    %c0_12 = arith.constant 0 : index
    %c2_13 = arith.constant 2 : index
    %16 = vector.load %arg5[%c0_11, %c0_12, %c2_13] : memref<2x8x16xf32, #tpu.memory_space<vmem>>, vector<2x8x14xf32>
    tpu.vector_store %arg5[%c0_11, %c0_12, %c2_13], %15 {strides = array<i32>} : memref<2x8x16xf32, #tpu.memory_space<vmem>>, vector<2x8x14xf32>,
    %c0_14 = arith.constant 0 : index
    %c0_15 = arith.constant 0 : index
    %c1 = arith.constant 1 : index
    %17 = vector.load %arg5[%c0_14, %c0_15, %c1] : memref<2x8x16xf32, #tpu.memory_space<vmem>>, vector<2x8x15xf32>
    %18 = vector.extract_strided_slice %0 {offsets = [0, 0, 0], sizes = [2, 4, 15], strides = [1, 1, 1]} : vector<2x4x16xf32> to vector<2x4x15xf32>
    %19 = vector.extract_strided_slice %1 {offsets = [1, 0, 0], sizes = [1, 8, 4], strides = [1, 1, 1]} : vector<3x8x4xf32> to vector<1x8x4xf32>
    %20 = vector.shape_cast %19 : vector<1x8x4xf32> to vector<8x4xf32>
    %21 = vector.shape_cast %20 : vector<8x4xf32> to vector<1x8x4xf32>
    %22 = vector.broadcast %21 : vector<1x8x4xf32> to vector<2x8x4xf32>
    %cst_16 = arith.constant dense<0.000000e+00> : vector<2x8x15xf32>
    %23 = tpu.matmul %22, %18, %cst_16 {dimension_numbers = #tpu.dot_dimension_numbers<[2], [1], [1], [2], [0, 0, 0, 1, 1, 2], [0], [0]>} : vector<2x8x4xf32>, vector<2x4x15xf32>, vector<2x8x15xf32> -> vector<2x8x15xf32>
    %24 = arith.addf %17, %23 : vector<2x8x15xf32>
    %c0_17 = arith.constant 0 : index
    %c0_18 = arith.constant 0 : index
    %c1_19 = arith.constant 1 : index
    %25 = vector.load %arg5[%c0_17, %c0_18, %c1_19] : memref<2x8x16xf32, #tpu.memory_space<vmem>>, vector<2x8x15xf32>
    tpu.vector_store %arg5[%c0_17, %c0_18, %c1_19], %24 {strides = array<i32>} : memref<2x8x16xf32, #tpu.memory_space<vmem>>, vector<2x8x15xf32>,
    %c0_20 = arith.constant 0 : index
    %c0_21 = arith.constant 0 : index
    %c0_22 = arith.constant 0 : index
    %26 = vector.load %arg5[%c0_20, %c0_21, %c0_22] : memref<2x8x16xf32, #tpu.memory_space<vmem>>, vector<2x8x16xf32>
    %c0_23 = arith.constant 0 : index
    %c0_24 = arith.constant 0 : index
    %27 = vector.load %arg3[%c0_23, %c0_24] : memref<8x1xf32, #tpu.memory_space<vmem>>, vector<8x1xf32>
    %28 = vector.shape_cast %27 : vector<8x1xf32> to vector<1x8x1xf32>
    %29 = vector.broadcast %28 : vector<1x8x1xf32> to vector<2x8x16xf32>
    %30 = arith.addf %26, %29 : vector<2x8x16xf32>
    %cst_25 = arith.constant 0.000000e+00 : f32
    %31 = vector.broadcast %cst_25 : f32 to vector<2x8x16xf32>
    %32 = arith.maximumf %30, %31 : vector<2x8x16xf32>
    %c0_26 = arith.constant 0 : index
    %c0_27 = arith.constant 0 : index
    %c0_28 = arith.constant 0 : index
    %33 = vector.load %arg4[%c0_26, %c0_27, %c0_28] : memref<2x8x16xf32, #tpu.memory_space<vmem>>, vector<2x8x16xf32>
    tpu.vector_store %arg4[%c0_26, %c0_27, %c0_28], %32 {strides = array<i32>} : memref<2x8x16xf32, #tpu.memory_space<vmem>>, vector<2x8x16xf32>,
    return
  }
  func.func @transform_0(%arg0: i32) -> (i32, i32, i32) {
    %c0_i32 = arith.constant 0 : i32
    %c0_i32_0 = arith.constant 0 : i32
    %c0_i32_1 = arith.constant 0 : i32
    return %arg0, %c0_i32, %c0_i32_0 : i32, i32, i32
  }
  func.func @transform_1(%arg0: i32) -> (i32, i32, i32) {
    %c0_i32 = arith.constant 0 : i32
    %c0_i32_0 = arith.constant 0 : i32
    %c0_i32_1 = arith.constant 0 : i32
    %c0_i32_2 = arith.constant 0 : i32
    return %c0_i32, %c0_i32_0, %c0_i32_1 : i32, i32, i32
  }
  func.func @transform_2(%arg0: i32) -> (i32, i32) {
    %c0_i32 = arith.constant 0 : i32
    %c0_i32_0 = arith.constant 0 : i32
    %c0_i32_1 = arith.constant 0 : i32
    return %c0_i32, %c0_i32_0 : i32, i32
  }
  func.func @transform_3(%arg0: i32) -> (i32, i32, i32) {
    %c0_i32 = arith.constant 0 : i32
    %c0_i32_0 = arith.constant 0 : i32
    %c0_i32_1 = arith.constant 0 : i32
    return %arg0, %c0_i32, %c0_i32_0 : i32, i32, i32
  }
}

</mosaic_0001>

<llo_original>
// kernel: tpu_custom_call.1
$region0: #{tpu_custom_call.1}
  #allocation0 [shape = 'u32[]', space=smem, size = 0x4, offset = 0x4, fixed_abs, tag = 'smem constant byte address 0x4 - core index']
  #allocation1 [shape = 'u32[72,128]{1,0:T(1,128)}', space=vmem, size = 0x9000, scoped, tag = 'internal scratch']
  #allocation2 [shape = 'f32[2,8,16]{2,1,0:T(8,128)}', space=vmem, size = 0x2000, scoped, tag = 'scratch operand']
  %s0 = inlined_call_operand.vmem [shape: f32[2,4,16], index: 0, kind: input, shape index: {}]
  %s1 = inlined_call_operand.vmem [shape: f32[3,8,4], index: 1, kind: input, shape index: {}]
  %s2 = inlined_call_operand.vmem [shape: f32[8,1], index: 2, kind: input, shape index: {}]
  %s3 = inlined_call_operand.hbm [shape: f32[2,8,16], index: 3, kind: output, shape index: {}]
  %s4 = sld [smem:[#allocation0]]
  $region22: #{tpu_custom_call.1} parent=0
    _
  %s6 = ssub.s32 1, %s4
  %s7 = scalar_select 0, %s6, %s4
  $region1: #{tpu_custom_call.1} parent=0
    #allocation3 [shape = 'u8[8192]{0}', space=vmem, size = 0x2000, scoped, tag = 'output window, operand 0, single buffered']
    #allocation4 [shape = 's32[1]{0}', space=sflag, size = 0x4, scoped, tag = 'scoped memory for tpu_custom_call.1']
    %8 = vsyncpa [#allocation4], 0
    // Predicated region
    $region2: #{tpu_custom_call.1} parent=1 // pred_check
      _
    $region3: #{tpu_custom_call.1} parent=1 // pred_check_branch
      %10 = sbr.rel (0) target = $region5
    $region4: #{tpu_custom_call.1} parent=1 // pred_region
      _
    $region5: #{tpu_custom_call.1} parent=1 // pred_fallthru
      _
    // Predicated region
    $region6: #{tpu_custom_call.1} parent=1 // pred_check
      _
    $region7: #{tpu_custom_call.1} parent=1 // pred_check_branch
      %12 = sbr.rel (0) target = $region9
    $region8: #{tpu_custom_call.1} parent=1 // pred_region
      _
    $region9: #{tpu_custom_call.1} parent=1 // pred_fallthru
      _
    // Predicated region
    $region10: #{tpu_custom_call.1} parent=1 // pred_check
      _
    $region11: #{tpu_custom_call.1} parent=1 // pred_check_branch
      %14 = sbr.rel (0) target = $region13
    $region12: #{tpu_custom_call.1} parent=1 // pred_region
      _
    $region13: #{tpu_custom_call.1} parent=1 // pred_fallthru
      _
    %v15 = vld [vmem:[%s0] sm:$0xf]
    %v16 = vld [vmem:[%s0 + $0x4] sm:$0xf]
    %v17 = vld [vmem:[%s1] sm:$0xff]
    %v18 = vld [vmem:[%s1 + $0x8] sm:$0xff]
    %v19 = vld [vmem:[%s1 + $0x10] sm:$0xff]
    %vm20 = vcmask 31744
    %v22 = vsel %vm20, %v19, 0
    %vm24 = vcmask 1043456
    %v26 = vsel %vm24, %v15, 0
    %28 = vmatpush.msra.mxu0 0.0
    %29 = vmatpush.msra.mxu0 0.0
    %30 = vmatpush.msra.mxu0 0.0
    %31 = vmatpush.msra.mxu0 0.0
    %32 = vmatpush.msra.mxu0 0.0
    %33 = vmatpush.msra.mxu0 0.0
    %34 = vmatpush.msra.mxu0 0.0
    %35 = vmatpush.msra.mxu0 0.0
    %36 = vmatpush.msra.mxu0 0.0
    %37 = vmatpush.msra.mxu0 0.0
    %38 = vmatpush.msra.mxu0 0.0
    %39 = vmatpush.msra.mxu0 0.0
    %40 = vmatpush.msra.mxu0 0.0
    %41 = vmatpush.msra.mxu0 0.0
    %42 = vmatpush.msra.mxu0 0.0
    %43 = vmatpush.msra.mxu0 %v26
    %44 = vmatmul.f32.gmra.mxu0 %v22
    %v45 = vpop.f32.mrf.mxu0
    %v46 = vadd.f32 0.0, %v45
    %47 = vdwg.mxu0
    %v49 = vsel %vm24, %v16, 0
    %51 = vmatpush.msra.mxu0 0.0
    %52 = vmatpush.msra.mxu0 0.0
    %53 = vmatpush.msra.mxu0 0.0
    %54 = vmatpush.msra.mxu0 0.0
    %55 = vmatpush.msra.mxu0 0.0
    %56 = vmatpush.msra.mxu0 0.0
    %57 = vmatpush.msra.mxu0 0.0
    %58 = vmatpush.msra.mxu0 0.0
    %59 = vmatpush.msra.mxu0 0.0
    %60 = vmatpush.msra.mxu0 0.0
    %61 = vmatpush.msra.mxu0 0.0
    %62 = vmatpush.msra.mxu0 0.0
    %63 = vmatpush.msra.mxu0 0.0
    %64 = vmatpush.msra.mxu0 0.0
    %65 = vmatpush.msra.mxu0 0.0
    %66 = vmatpush.msra.mxu0 %v49
    %67 = vmatmul.f32.gmra.mxu0 %v22
    %v68 = vpop.f32.mrf.mxu0
    %v69 = vadd.f32 0.0, %v68
    %70 = vdwg.mxu0
    %vm71 = vcmask 130048
    %72 = vst.msk [vmem:[#allocation2] sm:$0xff] %vm71, %v46
    %73 = vst.msk [vmem:[#allocation2 + $0x8] sm:$0xff] %vm71, %v69
    %v74 = vld [vmem:[#allocation2] sm:$0xff]
    %v75 = vld [vmem:[#allocation2 + $0x8] sm:$0xff]
    %v77 = vsel %vm20, %v17, 0
    %79 = vmatpush.msra.mxu0 0.0
    %80 = vmatpush.msra.mxu0 0.0
    %81 = vmatpush.msra.mxu0 0.0
    %82 = vmatpush.msra.mxu0 0.0
    %83 = vmatpush.msra.mxu0 0.0
    %84 = vmatpush.msra.mxu0 0.0
    %85 = vmatpush.msra.mxu0 0.0
    %86 = vmatpush.msra.mxu0 0.0
    %87 = vmatpush.msra.mxu0 0.0
    %88 = vmatpush.msra.mxu0 0.0
    %89 = vmatpush.msra.mxu0 0.0
    %90 = vmatpush.msra.mxu0 0.0
    %91 = vmatpush.msra.mxu0 0.0
    %92 = vmatpush.msra.mxu0 0.0
    %93 = vmatpush.msra.mxu0 0.0
    %94 = vmatpush.msra.mxu0 %v26
    %95 = vmatmul.f32.gmra.mxu0 %v77
    %v96 = vpop.f32.mrf.mxu0
    %v97 = vadd.f32 0.0, %v96
    %98 = vdwg.mxu0
    %99 = vmatpush.msra.mxu0 0.0
    %100 = vmatpush.msra.mxu0 0.0
    %101 = vmatpush.msra.mxu0 0.0
    %102 = vmatpush.msra.mxu0 0.0
    %103 = vmatpush.msra.mxu0 0.0
    %104 = vmatpush.msra.mxu0 0.0
    %105 = vmatpush.msra.mxu0 0.0
    %106 = vmatpush.msra.mxu0 0.0
    %107 = vmatpush.msra.mxu0 0.0
    %108 = vmatpush.msra.mxu0 0.0
    %109 = vmatpush.msra.mxu0 0.0
    %110 = vmatpush.msra.mxu0 0.0
    %111 = vmatpush.msra.mxu0 0.0
    %112 = vmatpush.msra.mxu0 0.0
    %113 = vmatpush.msra.mxu0 0.0
    %114 = vmatpush.msra.mxu0 %v49
    %115 = vmatmul.f32.gmra.mxu0 %v77
    %v116 = vpop.f32.mrf.mxu0
    %v117 = vadd.f32 0.0, %v116
    %118 = vdwg.mxu0
    %121 = vrot.lane.b32.xlu0 %v97, 2
    %v122 = vpop.permute.xlu0 %121
    %123 = vrot.lane.b32.xlu0 %v117, 2
    %v124 = vpop.permute.xlu0 %123
    %v127 = vadd.f32 %v74, %v122
    %v128 = vadd.f32 %v75, %v124
    %vm129 = vcmask 130064
    %130 = vst.msk [vmem:[#allocation2] sm:$0xff] %vm129, %v127
    %131 = vst.msk [vmem:[#allocation2 + $0x8] sm:$0xff] %vm129, %v128
    %v132 = vld [vmem:[#allocation2] sm:$0xff]
    %v133 = vld [vmem:[#allocation2 + $0x8] sm:$0xff]
    %v135 = vsel %vm20, %v18, 0
    %137 = vmatpush.msra.mxu0 0.0
    %138 = vmatpush.msra.mxu0 0.0
    %139 = vmatpush.msra.mxu0 0.0
    %140 = vmatpush.msra.mxu0 0.0
    %141 = vmatpush.msra.mxu0 0.0
    %142 = vmatpush.msra.mxu0 0.0
    %143 = vmatpush.msra.mxu0 0.0
    %144 = vmatpush.msra.mxu0 0.0
    %145 = vmatpush.msra.mxu0 0.0
    %146 = vmatpush.msra.mxu0 0.0
    %147 = vmatpush.msra.mxu0 0.0
    %148 = vmatpush.msra.mxu0 0.0
    %149 = vmatpush.msra.mxu0 0.0
    %150 = vmatpush.msra.mxu0 0.0
    %151 = vmatpush.msra.mxu0 0.0
    %152 = vmatpush.msra.mxu0 %v26
    %153 = vmatmul.f32.gmra.mxu0 %v135
    %v154 = vpop.f32.mrf.mxu0
    %v155 = vadd.f32 0.0, %v154
    %156 = vdwg.mxu0
    %157 = vmatpush.msra.mxu0 0.0
    %158 = vmatpush.msra.mxu0 0.0
    %159 = vmatpush.msra.mxu0 0.0
    %160 = vmatpush.msra.mxu0 0.0
    %161 = vmatpush.msra.mxu0 0.0
    %162 = vmatpush.msra.mxu0 0.0
    %163 = vmatpush.msra.mxu0 0.0
    %164 = vmatpush.msra.mxu0 0.0
    %165 = vmatpush.msra.mxu0 0.0
    %166 = vmatpush.msra.mxu0 0.0
    %167 = vmatpush.msra.mxu0 0.0
    %168 = vmatpush.msra.mxu0 0.0
    %169 = vmatpush.msra.mxu0 0.0
    %170 = vmatpush.msra.mxu0 0.0
    %171 = vmatpush.msra.mxu0 0.0
    %172 = vmatpush.msra.mxu0 %v49
    %173 = vmatmul.f32.gmra.mxu0 %v135
    %v174 = vpop.f32.mrf.mxu0
    %v175 = vadd.f32 0.0, %v174
    %176 = vdwg.mxu0
    %179 = vrot.lane.b32.xlu0 %v155, 1
    %v180 = vpop.permute.xlu0 %179
    %181 = vrot.lane.b32.xlu0 %v175, 1
    %v182 = vpop.permute.xlu0 %181
    %v185 = vadd.f32 %v132, %v180
    %v186 = vadd.f32 %v133, %v182
    %vm187 = vcmask 130056
    %188 = vst.msk [vmem:[#allocation2] sm:$0xff] %vm187, %v185
    %189 = vst.msk [vmem:[#allocation2 + $0x8] sm:$0xff] %vm187, %v186
    %v190 = vld [vmem:[#allocation2] sm:$0xff]
    %v191 = vld [vmem:[#allocation2 + $0x8] sm:$0xff]
    %v192 = vld [vmem:[%s2] sm:$0xff]
    %194 = vset.pattern.permute.xlu0 0
    %195 = vperm.xlu0 %194, %v192
    %v196 = vpop.permute.xlu0 %195
    %v198 = vadd.f32 %v190, %v196
    %v199 = vadd.f32 %v191, %v196
    %v200 = vmax.f32 %v198, 0.0
    %v201 = vmax.f32 %v199, 0.0
    %202 = vst.msk [vmem:[#allocation3] sm:$0xff] %vm71, %v200
    %203 = vst.msk [vmem:[#allocation3 + $0x8] sm:$0xff] %vm71, %v201
    // Predicated region
    $region14: #{tpu_custom_call.1} parent=1 // pred_check
      _
    $region15: #{tpu_custom_call.1} parent=1 // pred_check_branch
      %205 = sbr.rel (0) target = $region17
    $region16: #{tpu_custom_call.1} parent=1 // pred_region
      %207 = vsyncadd [#allocation4], 0
      %s208 = sshll.u32 [#allocation3], 4
      %s209 = int_to_ptr.vmem [resolvable:$true] %s208
      %s210 = sshll.u32 %s3, 4
      %s211 = int_to_ptr.hbm [resolvable:$true] %s210
      %216 = dma.vmem_to_hbm [thread:$0]  %s209, 256, %s211, [#allocation4], 128, 128, 8
    $region17: #{tpu_custom_call.1} parent=1 // pred_fallthru
      _
    // Predicated region
    $region18: #{tpu_custom_call.1} parent=1 // pred_check
      _
    $region19: #{tpu_custom_call.1} parent=1 // pred_check_branch
      %218 = sbr.rel (0) target = $region21
    $region20: #{tpu_custom_call.1} parent=1 // pred_region
      %220 = dma.done [#allocation4], 256
    $region21: #{tpu_custom_call.1} parent=1 // pred_fallthru
      _
    %221 = vsyncpa [#allocation4], 1

</llo_original>
